<compile_context>
chip_gen: v5e
topology: v5e:2x2
jax: 0.10.0
libtpu: 0.0.40
codegen_flags: <defaults>
</compile_context>

<pallas_src>
import jax
import jax.numpy as jnp
from jax.experimental import pallas as pl
from jax.experimental.pallas import tpu as pltpu


def _round_up(a, b):
    return ((a + b - 1) // b) * b


def _bond_float_rbf_kernel(x_ref, g_ref, c_ref, w_ref, b_ref, out_ref):
    # x_ref  : [F, TILE_N]   raw bond scalars, lane-dense on the bond axis
    # g_ref  : [F, 1]        sqrt(gamma) per feature (x is scaled in-kernel)
    # c_ref  : [F, Kp, 1]    sqrt(gamma)-scaled centers, K padded to Kp (mult of 8)
    # w_ref  : [E, F*Kp]     fused linear weights (padded-K columns are zero)
    # b_ref  : [E, 1]        per-feature biases summed once in the wrapper
    # out_ref: [TILE_N, E]   output tile stored directly in [N, E] layout
    num_feats = x_ref.shape[0]
    parts = []
    for f in range(num_feats):                        # static unroll; F is tiny
        x_f = x_ref[f:f + 1, :] * g_ref[f:f + 1, :]   # [1, TILE_N]  in-kernel scale
        diff = x_f - c_ref[f]                         # [Kp, TILE_N] sublane/lane bcast
        parts.append(jnp.exp(-(diff * diff)))         # EUP, lane-dense on bonds
    # Kp is a multiple of 8, so the sublane concat offsets are tile-aligned.
    rbf = parts[0] if num_feats == 1 else jnp.concatenate(parts, axis=0)  # [F*Kp, TILE_N]
    acc = jnp.dot(w_ref[...], rbf,                    # [E, F*Kp] @ [F*Kp, TILE_N] (MXU)
                  preferred_element_type=jnp.float32)
    acc = acc + b_ref[...]                            # bias broadcast across lanes
    out_ref[...] = acc.T.astype(out_ref.dtype)        # XLU transpose -> [TILE_N, E]


def bond_float_rbf(xs, centers, gammas, weights, biases, *,
                   tile_n=2048, out_dtype=jnp.float32):
    """xs:[F,N] (or [F,N,1]) centers:[F,K] gammas:[F] weights:[F,K,E] biases:[F,E] -> [N,E]."""
    F = xs.shape[0]
    xs2 = xs.reshape(F, -1).astype(jnp.float32)       # [F, N] lane-dense, unscaled
    N = xs2.shape[1]
    K = centers.shape[-1]
    E = weights.shape[-1]
    Kp = _round_up(K, 8)                              # sublane-align each feature block

    # exp(-g*(x-c)^2) is folded as exp(-((sqrt(g)*x - sqrt(g)*c)^2)); requires g >= 0
    # (true for the module defaults, gamma = 10).  Only the K-sized centers are scaled
    # here; x is scaled inside the kernel to avoid an extra HBM pass over [F, N].
    sqrt_g = jnp.sqrt(gammas.astype(jnp.float32))                             # [F]
    g_col = sqrt_g[:, None]                                                   # [F, 1]
    c_pad = jnp.pad(centers.astype(jnp.float32) * g_col, ((0, 0), (0, Kp - K)))
    c3 = c_pad[:, :, None]                                                    # [F, Kp, 1]
    w_pad = jnp.pad(weights.astype(jnp.float32), ((0, 0), (0, Kp - K), (0, 0)))  # [F, Kp, E]
    w2 = jnp.transpose(w_pad, (2, 0, 1)).reshape(E, F * Kp)                   # [E, F*Kp]
    b2 = jnp.sum(biases.astype(jnp.float32), axis=0)[:, None]                 # [E, 1]

    # Tile selection: large tiles amortize per-grid-step overhead; cap so the tile
    # never wildly exceeds N (ragged-tail waste) and so v7x keeps >= 2 parallel steps.
    tile_n = _round_up(max(tile_n, 128), 128)
    tile_n = min(tile_n, _round_up(N, 128))
    if N > 256:
        tile_n = min(tile_n, max(128, _round_up(pl.cdiv(N, 2), 128)))
    grid = (pl.cdiv(N, tile_n),)                      # ragged last tile handled by Pallas

    cost = pl.CostEstimate(
        flops=2 * N * E * F * Kp,
        transcendentals=N * F * Kp,
        bytes_accessed=4 * (F * N + N * E + F * Kp * (1 + E) + E),
    )

    return pl.pallas_call(
        _bond_float_rbf_kernel,
        out_shape=jax.ShapeDtypeStruct((N, E), out_dtype),
        grid=grid,
        in_specs=[
            pl.BlockSpec((F, tile_n), lambda i: (0, i)),     # x, tiled on lanes
            pl.BlockSpec((F, 1), lambda i: (0, 0)),          # sqrt(gamma), hoisted
            pl.BlockSpec((F, Kp, 1), lambda i: (0, 0, 0)),   # scaled centers, hoisted
            pl.BlockSpec((E, F * Kp), lambda i: (0, 0)),     # fused weights, hoisted
            pl.BlockSpec((E, 1), lambda i: (0, 0)),          # summed bias, hoisted
        ],
        out_specs=pl.BlockSpec((tile_n, E), lambda i: (i, 0)),
        compiler_params=pltpu.CompilerParams(
            dimension_semantics=("parallel",)),
        cost_estimate=cost,
    )(xs2, g_col, c3, w2, b2)


def reference(xs, centers, gammas, weights, biases):
    """Pure-JAX mirror of the PyTorch forward (per-feature RBF + Linear, summed)."""
    out = 0.0
    F = xs.shape[0]
    for i in range(F):
        x = xs[i].reshape(-1, 1)                                   # [N, 1]
        c = centers[i].reshape(1, -1)                              # [1, K]
        rbf = jnp.exp(-gammas[i] * jnp.square(x - c))              # [N, K]
        out = out + rbf @ weights[i] + biases[i]                   # [N, E]
    return out


if __name__ == "__main__":
    key = jax.random.PRNGKey(0)

    # Module config (BondFloatRBF defaults plus a 2nd feature to exercise the
    # feature-sum path; rbf_params is a constructor arg).
    bond_float_names = ["bond_length", "bond_angle"]
    rbf_params = {
        "bond_length": (jnp.arange(0.0, 2.0, 0.1, dtype=jnp.float32), 10.0),
        "bond_angle":  (jnp.arange(0.0, 2.0, 0.1, dtype=jnp.float32), 10.0),
    }
    embed_dim = 32
    num_bonds = 777        # deliberately not a tile multiple: exercises the ragged tile

    F = len(bond_float_names)
    K = rbf_params[bond_float_names[0]][0].shape[0]   # 20 centers

    keys = jax.random.split(key, 3 * F)
    bound = 1.0 / jnp.sqrt(jnp.float32(K))
    weights = jnp.stack([
        jax.random.uniform(keys[3 * i], (K, embed_dim), jnp.float32, -bound, bound)
        for i in range(F)
    ])                                                # [F, K, E]
    biases = jnp.stack([
        jax.random.uniform(keys[3 * i + 1], (embed_dim,), jnp.float32, -bound, bound)
        for i in range(F)
    ])                                                # [F, E]
    xs = jnp.stack([
        jax.random.uniform(keys[3 * i + 2], (num_bonds,), jnp.float32, 0.0, 2.0)
        for i in range(F)
    ])                                                # [F, N]

    centers = jnp.stack([rbf_params[name][0] for name in bond_float_names])  # [F, K]
    gammas = jnp.array([rbf_params[name][1] for name in bond_float_names],
                       dtype=jnp.float32)                                    # [F]

    out = bond_float_rbf(xs, centers, gammas, weights, biases)
    out = jax.block_until_ready(out)

    ref = reference(xs, centers, gammas, weights, biases)
    assert out.shape == (num_bonds, embed_dim)
    # Tolerance absorbs the sqrt(gamma) folding (exponent drift <= ~1e-5) and
    # the transposed matmul orientation; any real bug shows up far above 1e-4.
    assert jnp.allclose(out, ref, atol=1e-4, rtol=1e-4), "mismatch vs reference"

    print("KERNEL_OK")
</pallas_src>

<mosaic_0001>
module attributes {stable_mosaic.version = 11 : i64} {
  func.func @_bond_float_rbf_kernel(%arg0: i32, %arg1: memref<2x512xf32, #tpu.memory_space<vmem>>, %arg2: memref<2x1xf32, #tpu.memory_space<vmem>>, %arg3: memref<2x24x1xf32, #tpu.memory_space<vmem>>, %arg4: memref<32x48xf32, #tpu.memory_space<vmem>>, %arg5: memref<32x1xf32, #tpu.memory_space<vmem>>, %arg6: memref<512x32xf32, #tpu.memory_space<vmem>>) attributes {dimension_semantics = [#tpu.dimension_semantics<parallel>], iteration_bounds = array<i64: 2>, scalar_prefetch = 0 : i64, scratch_operands = 0 : i64, tpu.core_type = #tpu.core_type<tc>, window_params = [{transform_indices = @transform_0, window_bounds = array<i64: 2, 512>}, {pipeline_mode = #tpu.pipeline_mode<synchronous>, transform_indices = @transform_1, window_bounds = array<i64: 2, 1>}, {pipeline_mode = #tpu.pipeline_mode<synchronous>, transform_indices = @transform_2, window_bounds = array<i64: 2, 24, 1>}, {pipeline_mode = #tpu.pipeline_mode<synchronous>, transform_indices = @transform_3, window_bounds = array<i64: 32, 48>}, {pipeline_mode = #tpu.pipeline_mode<synchronous>, transform_indices = @transform_4, window_bounds = array<i64: 32, 1>}, {transform_indices = @transform_5, window_bounds = array<i64: 512, 32>}]} {
    %c0 = arith.constant 0 : index
    %c0_0 = arith.constant 0 : index
    %0 = vector.load %arg1[%c0, %c0_0] : memref<2x512xf32, #tpu.memory_space<vmem>>, vector<1x512xf32>
    %c0_1 = arith.constant 0 : index
    %c0_2 = arith.constant 0 : index
    %1 = vector.load %arg2[%c0_1, %c0_2] : memref<2x1xf32, #tpu.memory_space<vmem>>, vector<1x1xf32>
    %2 = vector.broadcast %1 : vector<1x1xf32> to vector<1x512xf32>
    %3 = arith.mulf %0, %2 : vector<1x512xf32>
    %c0_3 = arith.constant 0 : index
    %c0_4 = arith.constant 0 : index
    %c0_5 = arith.constant 0 : index
    %4 = vector.load %arg3[%c0_3, %c0_4, %c0_5] : memref<2x24x1xf32, #tpu.memory_space<vmem>>, vector<1x24x1xf32>
    %5 = vector.shape_cast %4 : vector<1x24x1xf32> to vector<24x1xf32>
    %6 = vector.broadcast %3 : vector<1x512xf32> to vector<24x512xf32>
    %7 = vector.broadcast %5 : vector<24x1xf32> to vector<24x512xf32>
    %8 = arith.subf %6, %7 : vector<24x512xf32>
    %9 = arith.mulf %8, %8 : vector<24x512xf32>
    %cst = arith.constant 0.000000e+00 : f32
    %10 = vector.broadcast %cst : f32 to vector<24x512xf32>
    %11 = arith.subf %10, %9 : vector<24x512xf32>
    %12 = math.exp %11 : vector<24x512xf32>
    %c1 = arith.constant 1 : index
    %c0_6 = arith.constant 0 : index
    %13 = vector.load %arg1[%c1, %c0_6] : memref<2x512xf32, #tpu.memory_space<vmem>>, vector<1x512xf32>
    %c1_7 = arith.constant 1 : index
    %c0_8 = arith.constant 0 : index
    %14 = vector.load %arg2[%c1_7, %c0_8] : memref<2x1xf32, #tpu.memory_space<vmem>>, vector<1x1xf32>
    %15 = vector.broadcast %14 : vector<1x1xf32> to vector<1x512xf32>
    %16 = arith.mulf %13, %15 : vector<1x512xf32>
    %c1_9 = arith.constant 1 : index
    %c0_10 = arith.constant 0 : index
    %c0_11 = arith.constant 0 : index
    %17 = vector.load %arg3[%c1_9, %c0_10, %c0_11] : memref<2x24x1xf32, #tpu.memory_space<vmem>>, vector<1x24x1xf32>
    %18 = vector.shape_cast %17 : vector<1x24x1xf32> to vector<24x1xf32>
    %19 = vector.broadcast %16 : vector<1x512xf32> to vector<24x512xf32>
    %20 = vector.broadcast %18 : vector<24x1xf32> to vector<24x512xf32>
    %21 = arith.subf %19, %20 : vector<24x512xf32>
    %22 = arith.mulf %21, %21 : vector<24x512xf32>
    %cst_12 = arith.constant 0.000000e+00 : f32
    %23 = vector.broadcast %cst_12 : f32 to vector<24x512xf32>
    %24 = arith.subf %23, %22 : vector<24x512xf32>
    %25 = math.exp %24 : vector<24x512xf32>
    %26 = tpu.concatenate %12, %25 in 0 : vector<24x512xf32>, vector<24x512xf32> -> vector<48x512xf32>
    %c0_13 = arith.constant 0 : index
    %c0_14 = arith.constant 0 : index
    %27 = vector.load %arg4[%c0_13, %c0_14] : memref<32x48xf32, #tpu.memory_space<vmem>>, vector<32x48xf32>
    %cst_15 = arith.constant dense<0.000000e+00> : vector<32x512xf32>
    %28 = tpu.matmul %27, %26, %cst_15 {dimension_numbers = #tpu.dot_dimension_numbers<[1], [0], [0], [1], [0, 0, 1, 1], [], []>} : vector<32x48xf32>, vector<48x512xf32>, vector<32x512xf32> -> vector<32x512xf32>
    %c0_16 = arith.constant 0 : index
    %c0_17 = arith.constant 0 : index
    %29 = vector.load %arg5[%c0_16, %c0_17] : memref<32x1xf32, #tpu.memory_space<vmem>>, vector<32x1xf32>
    %30 = vector.broadcast %29 : vector<32x1xf32> to vector<32x512xf32>
    %31 = arith.addf %28, %30 : vector<32x512xf32>
    %32 = tpu.transpose %31, [1, 0] : vector<32x512xf32> -> vector<512x32xf32>
    %c0_18 = arith.constant 0 : index
    %c0_19 = arith.constant 0 : index
    %33 = vector.load %arg6[%c0_18, %c0_19] : memref<512x32xf32, #tpu.memory_space<vmem>>, vector<512x32xf32>
    tpu.vector_store %arg6[%c0_18, %c0_19], %32 {strides = array<i32>} : memref<512x32xf32, #tpu.memory_space<vmem>>, vector<512x32xf32>,
    return
  }
  func.func @transform_0(%arg0: i32) -> (i32, i32) {
    %c0_i32 = arith.constant 0 : i32
    %c0_i32_0 = arith.constant 0 : i32
    return %c0_i32, %arg0 : i32, i32
  }
  func.func @transform_1(%arg0: i32) -> (i32, i32) {
    %c0_i32 = arith.constant 0 : i32
    %c0_i32_0 = arith.constant 0 : i32
    %c0_i32_1 = arith.constant 0 : i32
    return %c0_i32, %c0_i32_0 : i32, i32
  }
  func.func @transform_2(%arg0: i32) -> (i32, i32, i32) {
    %c0_i32 = arith.constant 0 : i32
    %c0_i32_0 = arith.constant 0 : i32
    %c0_i32_1 = arith.constant 0 : i32
    %c0_i32_2 = arith.constant 0 : i32
    return %c0_i32, %c0_i32_0, %c0_i32_1 : i32, i32, i32
  }
  func.func @transform_3(%arg0: i32) -> (i32, i32) {
    %c0_i32 = arith.constant 0 : i32
    %c0_i32_0 = arith.constant 0 : i32
    %c0_i32_1 = arith.constant 0 : i32
    return %c0_i32, %c0_i32_0 : i32, i32
  }
  func.func @transform_4(%arg0: i32) -> (i32, i32) {
    %c0_i32 = arith.constant 0 : i32
    %c0_i32_0 = arith.constant 0 : i32
    %c0_i32_1 = arith.constant 0 : i32
    return %c0_i32, %c0_i32_0 : i32, i32
  }
  func.func @transform_5(%arg0: i32) -> (i32, i32) {
    %c0_i32 = arith.constant 0 : i32
    %c0_i32_0 = arith.constant 0 : i32
    return %arg0, %c0_i32 : i32, i32
  }
}

</mosaic_0001>

<llo_original>
// kernel: tpu_custom_call.1
$region0: #{tpu_custom_call.1}
  #allocation0 [shape = 'u32[]', space=smem, size = 0x4, offset = 0x4, fixed_abs, tag = 'smem constant byte address 0x4 - core index']
  #allocation1 [shape = 'u32[72,128]{1,0:T(1,128)}', space=vmem, size = 0x9000, scoped, tag = 'internal scratch']
  %s0 = inlined_call_operand.vmem [shape: f32[2,777], index: 0, kind: input, shape index: {}]
  %s1 = inlined_call_operand.vmem [shape: f32[2,1], index: 1, kind: input, shape index: {}]
  %s2 = inlined_call_operand.vmem [shape: f32[2,24,1], index: 2, kind: input, shape index: {}]
  %s3 = inlined_call_operand.vmem [shape: f32[32,48], index: 3, kind: input, shape index: {}]
  %s4 = inlined_call_operand.vmem [shape: f32[32,1], index: 4, kind: input, shape index: {}]
  %s5 = inlined_call_operand.vmem [shape: f32[777,32], index: 5, kind: output, shape index: {}]
  %s6 = sld [smem:[#allocation0]]
  $region101: #{tpu_custom_call.1} parent=0
    _
  %s8 = ssub.s32 1, %s6
  %s9 = scalar_select 0, %s8, %s6
  $region1: #{tpu_custom_call.1} parent=0
    #allocation2 [shape = 'u8[524288]{0}', space=vmem, size = 0x80000, scoped, tag = 'output window, operand 0']
    loop: start=0, step=1, limit=4
    $region2: #{tpu_custom_call.1} parent=1 // loop_pre_header
      _
    $region3: #{tpu_custom_call.1} parent=1 // loop_header
      %s11 = sphi 0, %s15
      %p12 = scmp.ge.s32.totalorder %s11, 4
      %s21 = sphi 0, %s23
      %s24 = sphi 0, %s21
      %s25 = sphi 0, %s24
      %s41 = sphi 0, %s25
      %s45 = sphi 0, %s45
      %s47 = sphi 0, %s45
      %s48 = sphi 0, %s47
      %s62 = sphi 0, %s48
      %s66 = sphi 0, %s66
      %s68 = sphi 0, %s66
      %s69 = sphi 0, %s68
      %s83 = sphi 0, %s69
      %s87 = sphi 0, %s87
      %s89 = sphi 0, %s87
      %s90 = sphi 0, %s89
      %s104 = sphi 0, %s90
      %s108 = sphi 0, %s108
      %s110 = sphi 0, %s108
      %s111 = sphi 0, %s110
      %s125 = sphi 0, %s111
      %s131 = sphi 0, %s133
      %s134 = sphi 0, %s131
      %s135 = sphi 0, %s134
      %s151 = sphi 0, %s135
    $region4: #{tpu_custom_call.1} parent=1 // loop_header_branch
      %14 = sbr.rel (%p12) target = $region8
    $region5: #{tpu_custom_call.1} parent=1 // loop_body
      %s16 = ssub.s32 %s11, 1
      %s17 = ssub.s32 %s11, 2
      %s18 = sadd.s32 %s11, 1
      %s19 = ssub.s32 %s11, %s18
      %p20 = scmp.eq.s32.totalorder %s19, 0
      %s22 = sadd.s32 %s21, 1
      %s23 = scalar_select %p20, %s21, %s22
      %p26 = pneg %p20
      %p27 = scmp.eq.s32.totalorder %s11, 1
      %p28 = por %p26, %p27
      %p29 = scmp.ne.s32.totalorder %s21, %s24
      %p30 = scmp.eq.s32.totalorder %s11, 0
      %p31 = por %p29, %p30
      %p32 = scmp.ne.s32.totalorder %s21, %s24
      %p33 = scmp.eq.s32.totalorder %s16, 1
      %p34 = por %p32, %p33
      %p35 = scmp.ne.s32.totalorder %s24, %s25
      %p36 = scmp.eq.s32.totalorder %s16, 0
      %p37 = por %p35, %p36
      %p38 = scmp.ne.s32.totalorder %s24, %s25
      %p39 = scmp.eq.s32.totalorder %s17, 1
      %p40 = por %p38, %p39
      %p42 = scmp.ne.s32.totalorder %s25, %s41
      %p43 = scmp.eq.s32.totalorder %s17, 0
      %p44 = por %p42, %p43
      %s46 = sadd.s32 %s45, 1
      %p49 = scmp.eq.s32.totalorder %s11, 1
      %p50 = scmp.ne.s32.totalorder %s45, %s47
      %p51 = scmp.eq.s32.totalorder %s11, 0
      %p52 = por %p50, %p51
      %p53 = scmp.ne.s32.totalorder %s45, %s47
      %p54 = scmp.eq.s32.totalorder %s16, 1
      %p55 = por %p53, %p54
      %p56 = scmp.ne.s32.totalorder %s47, %s48
      %p57 = scmp.eq.s32.totalorder %s16, 0
      %p58 = por %p56, %p57
      %p59 = scmp.ne.s32.totalorder %s47, %s48
      %p60 = scmp.eq.s32.totalorder %s17, 1
      %p61 = por %p59, %p60
      %p63 = scmp.ne.s32.totalorder %s48, %s62
      %p64 = scmp.eq.s32.totalorder %s17, 0
      %p65 = por %p63, %p64
      %s67 = sadd.s32 %s66, 1
      %p70 = scmp.eq.s32.totalorder %s11, 1
      %p71 = scmp.ne.s32.totalorder %s66, %s68
      %p72 = scmp.eq.s32.totalorder %s11, 0
      %p73 = por %p71, %p72
      %p74 = scmp.ne.s32.totalorder %s66, %s68
      %p75 = scmp.eq.s32.totalorder %s16, 1
      %p76 = por %p74, %p75
      %p77 = scmp.ne.s32.totalorder %s68, %s69
      %p78 = scmp.eq.s32.totalorder %s16, 0
      %p79 = por %p77, %p78
      %p80 = scmp.ne.s32.totalorder %s68, %s69
      %p81 = scmp.eq.s32.totalorder %s17, 1
      %p82 = por %p80, %p81
      %p84 = scmp.ne.s32.totalorder %s69, %s83
      %p85 = scmp.eq.s32.totalorder %s17, 0
      %p86 = por %p84, %p85
      %s88 = sadd.s32 %s87, 1
      %p91 = scmp.eq.s32.totalorder %s11, 1
      %p92 = scmp.ne.s32.totalorder %s87, %s89
      %p93 = scmp.eq.s32.totalorder %s11, 0
      %p94 = por %p92, %p93
      %p95 = scmp.ne.s32.totalorder %s87, %s89
      %p96 = scmp.eq.s32.totalorder %s16, 1
      %p97 = por %p95, %p96
      %p98 = scmp.ne.s32.totalorder %s89, %s90
      %p99 = scmp.eq.s32.totalorder %s16, 0
      %p100 = por %p98, %p99
      %p101 = scmp.ne.s32.totalorder %s89, %s90
      %p102 = scmp.eq.s32.totalorder %s17, 1
      %p103 = por %p101, %p102
      %p105 = scmp.ne.s32.totalorder %s90, %s104
      %p106 = scmp.eq.s32.totalorder %s17, 0
      %p107 = por %p105, %p106
      %s109 = sadd.s32 %s108, 1
      %p112 = scmp.eq.s32.totalorder %s11, 1
      %p113 = scmp.ne.s32.totalorder %s108, %s110
      %p114 = scmp.eq.s32.totalorder %s11, 0
      %p115 = por %p113, %p114
      %p116 = scmp.ne.s32.totalorder %s108, %s110
      %p117 = scmp.eq.s32.totalorder %s16, 1
      %p118 = por %p116, %p117
      %p119 = scmp.ne.s32.totalorder %s110, %s111
      %p120 = scmp.eq.s32.totalorder %s16, 0
      %p121 = por %p119, %p120
      %p122 = scmp.ne.s32.totalorder %s110, %s111
      %p123 = scmp.eq.s32.totalorder %s17, 1
      %p124 = por %p122, %p123
      %p126 = scmp.ne.s32.totalorder %s111, %s125
      %p127 = scmp.eq.s32.totalorder %s17, 0
      %p128 = por %p126, %p127
      %s129 = ssub.s32 %s11, %s18
      %p130 = scmp.eq.s32.totalorder %s129, 0
      %s132 = sadd.s32 %s131, 1
      %s133 = scalar_select %p130, %s131, %s132
      %p136 = pneg %p130
      %p137 = scmp.eq.s32.totalorder %s11, 1
      %p138 = por %p136, %p137
      %p139 = scmp.ne.s32.totalorder %s131, %s134
      %p140 = scmp.eq.s32.totalorder %s11, 0
      %p141 = por %p139, %p140
      %p142 = scmp.ne.s32.totalorder %s131, %s134
      %p143 = scmp.eq.s32.totalorder %s16, 1
      %p144 = por %p142, %p143
      %p145 = scmp.ne.s32.totalorder %s134, %s135
      %p146 = scmp.eq.s32.totalorder %s16, 0
      %p147 = por %p145, %p146
      %p148 = scmp.ne.s32.totalorder %s134, %s135
      %p149 = scmp.eq.s32.totalorder %s17, 1
      %p150 = por %p148, %p149
      %p152 = scmp.ne.s32.totalorder %s135, %s151
      %p153 = scmp.eq.s32.totalorder %s17, 0
      %p154 = por %p152, %p153
      %p155 = scmp.le.s32.totalorder 1, %s11
      %p156 = scmp.lt.s32.totalorder %s11, 3
      %p157 = pnand %p155, %p156
      %p158 = pneg %p157
      // Predicated region
      $region9: #{tpu_custom_call.1} parent=5 // pred_check
        _
      $region10: #{tpu_custom_call.1} parent=5 // pred_check_branch
        %160 = sbr.rel (%p157) target = $region12
      $region11: #{tpu_custom_call.1} parent=5 // pred_region
        %s161 = ssub.s32 %s11, 1
        // Predicated region
        $region13: #{tpu_custom_call.1} parent=11 // pred_check
          %p162 = pneg %p58
        $region14: #{tpu_custom_call.1} parent=11 // pred_check_branch
          %164 = sbr.rel (%p162) target = $region16
        $region15: #{tpu_custom_call.1} parent=11 // pred_region
          _
        $region16: #{tpu_custom_call.1} parent=11 // pred_fallthru
          _
        // Predicated region
        $region17: #{tpu_custom_call.1} parent=11 // pred_check
          %p165 = pneg %p79
        $region18: #{tpu_custom_call.1} parent=11 // pred_check_branch
          %167 = sbr.rel (%p165) target = $region20
        $region19: #{tpu_custom_call.1} parent=11 // pred_region
          _
        $region20: #{tpu_custom_call.1} parent=11 // pred_fallthru
          _
        // Predicated region
        $region21: #{tpu_custom_call.1} parent=11 // pred_check
          %p168 = pneg %p100
        $region22: #{tpu_custom_call.1} parent=11 // pred_check_branch
          %170 = sbr.rel (%p168) target = $region24
        $region23: #{tpu_custom_call.1} parent=11 // pred_region
          _
        $region24: #{tpu_custom_call.1} parent=11 // pred_fallthru
          _
        // Predicated region
        $region25: #{tpu_custom_call.1} parent=11 // pred_check
          %p171 = pneg %p121
        $region26: #{tpu_custom_call.1} parent=11 // pred_check_branch
          %173 = sbr.rel (%p171) target = $region28
        $region27: #{tpu_custom_call.1} parent=11 // pred_region
          _
        $region28: #{tpu_custom_call.1} parent=11 // pred_fallthru
          _
      $region12: #{tpu_custom_call.1} parent=5 // pred_fallthru
        _
      %p174 = scmp.lt.s32.totalorder %s11, 2
      // Predicated region
      $region29: #{tpu_custom_call.1} parent=5 // pred_check
        %p175 = pneg %p174
      $region30: #{tpu_custom_call.1} parent=5 // pred_check_branch
        %177 = sbr.rel (%p175) target = $region32
      $region31: #{tpu_custom_call.1} parent=5 // pred_region
        // Predicated region
        $region33: #{tpu_custom_call.1} parent=31 // pred_check
          %p178 = pneg %p31
        $region34: #{tpu_custom_call.1} parent=31 // pred_check_branch
          %180 = sbr.rel (%p178) target = $region36
        $region35: #{tpu_custom_call.1} parent=31 // pred_region
          %s181 = smul.u32 4, %s11
          %s182 = ssub.s32 7, %s181
          %p183 = scmp.lt.s32.totalorder %s182, 4
          %s184 = scalar_select %p183, %s182, 4
          %s185 = smul.u32 2, %s184
          %p186 = scmp.lt.s32.totalorder %s181, 6
          %s187 = scalar_select %p186, %s181, 6
          %s188 = smul.addr %s187, 2
          %s189 = scalar_lea.vmem %s0, %s188
          %s190 = smul.u32 4, %s11
          %s191 = ssub.s32 7, %s190
          %p192 = scmp.lt.s32.totalorder %s191, 4
          %s193 = scalar_select %p192, %s191, 4
          %s194 = smul.u32 2, %s193
        $region36: #{tpu_custom_call.1} parent=31 // pred_fallthru
          _
      $region32: #{tpu_custom_call.1} parent=5 // pred_fallthru
        _
      %p195 = scmp.le.s32.totalorder 1, %s11
      %p196 = scmp.lt.s32.totalorder %s11, 3
      %p197 = pnand %p195, %p196
      %p198 = pneg %p197
      // Predicated region
      $region37: #{tpu_custom_call.1} parent=5 // pred_check
        _
      $region38: #{tpu_custom_call.1} parent=5 // pred_check_branch
        %200 = sbr.rel (%p197) target = $region40
      $region39: #{tpu_custom_call.1} parent=5 // pred_region
        %s201 = ssub.s32 %s11, 1
        %s202 = smul.u32 4, %s16
        %s203 = ssub.s32 7, %s202
        %p204 = scmp.lt.s32.totalorder %s203, 4
        %s205 = scalar_select %p204, %s203, 4
        %s206 = smul.u32 2, %s205
        %p207 = scmp.lt.s32.totalorder %s202, 6
        %s208 = scalar_select %p207, %s202, 6
        %s209 = smul.addr %s208, 2
        %s210 = scalar_lea.vmem %s0, %s209
        %p211 = pneg %p37
        %p212 = pneg %p34
        %p213 = pneg %p58
        %p214 = pneg %p55
        %p215 = pneg %p79
        %p216 = pneg %p76
        %p217 = pneg %p100
        %p218 = pneg %p97
        %p219 = pneg %p121
        %p220 = pneg %p118
        %p221 = pneg %p147
        %p222 = pneg %p144
        %s223 = sand.u32 %s134, 1
        %s224 = sand.u32 %s134, 1
        %s225 = smul.addr %s224, 512
        %s226 = scalar_lea.vmem [#allocation2], %s225
        %s227 = smul.u32 4, %s16
        %s228 = ssub.s32 7, %s227
        %p229 = scmp.lt.s32.totalorder %s228, 4
        %s230 = scalar_select %p229, %s228, 4
        %s231 = smul.u32 2, %s230
        %p232 = scmp.lt.s32.totalorder %s227, 6
        %s233 = scalar_select %p232, %s227, 6
        %s234 = smul.addr %s233, 2
        %s235 = scalar_lea.vmem %s0, %s234
        %s236 = smul.u32 4, %s16
        %s237 = ssub.s32 7, %s236
        %p238 = scmp.lt.s32.totalorder %s237, 4
        %s239 = scalar_select %p238, %s237, 4
        %s240 = smul.u32 2, %s239
        %s241 = smul.u32 64, %s16
        %s242 = ssub.s32 98, %s241
        %p243 = scmp.lt.s32.totalorder %s242, 64
        %s244 = scalar_select %p243, %s242, 64
        %s245 = smul.u32 8, %s244
        %v246 = vld [vmem:[%s235] ss:$2 sm:$0xf]
        %v247 = vld [vmem:[%s1] sm:$0x1]
        %249 = vset.pattern.permute.xlu0 0
        %250 = vperm.xlu0 %249, %v247
        %v251 = vpop.permute.xlu0 %250
        %v252 = vperm.slane %v251, 0
        %v254 = vmul.f32 %v246, %v252
        %v255 = vld [vmem:[%s2] sm:$0xff]
        %v256 = vld [vmem:[%s2 + $0x8] sm:$0xff]
        %v257 = vld [vmem:[%s2 + $0x10] sm:$0xff]
        %v259 = vperm.slane %v254, 0
        %v260 = vperm.slane %v254, 1
        %v261 = vperm.slane %v254, 2
        %v262 = vperm.slane %v254, 3
        %268 = vset.pattern.permute.xlu0 0
        %269 = vperm.xlu0 %268, %v255
        %v270 = vpop.permute.xlu0 %269
        %273 = vset.pattern.permute.xlu0 0
        %274 = vperm.xlu0 %273, %v256
        %v275 = vpop.permute.xlu0 %274
        %278 = vset.pattern.permute.xlu0 0
        %279 = vperm.xlu0 %278, %v257
        %v280 = vpop.permute.xlu0 %279
        %v282 = vsub.f32 %v259, %v270
        %v283 = vsub.f32 %v260, %v270
        %v284 = vsub.f32 %v261, %v270
        %v285 = vsub.f32 %v262, %v270
        %v286 = vsub.f32 %v259, %v275
        %v287 = vsub.f32 %v260, %v275
        %v288 = vsub.f32 %v261, %v275
        %v289 = vsub.f32 %v262, %v275
        %v290 = vsub.f32 %v259, %v280
        %v291 = vsub.f32 %v260, %v280
        %v292 = vsub.f32 %v261, %v280
        %v293 = vsub.f32 %v262, %v280
        %v294 = vmul.f32 %v282, %v282
        %v295 = vmul.f32 %v283, %v283
        %v296 = vmul.f32 %v284, %v284
        %v297 = vmul.f32 %v285, %v285
        %v298 = vmul.f32 %v286, %v286
        %v299 = vmul.f32 %v287, %v287
        %v300 = vmul.f32 %v288, %v288
        %v301 = vmul.f32 %v289, %v289
        %v302 = vmul.f32 %v290, %v290
        %v303 = vmul.f32 %v291, %v291
        %v304 = vmul.f32 %v292, %v292
        %v305 = vmul.f32 %v293, %v293
        %v306 = vsub.f32 0.0, %v294
        %v307 = vsub.f32 0.0, %v295
        %v308 = vsub.f32 0.0, %v296
        %v309 = vsub.f32 0.0, %v297
        %v310 = vsub.f32 0.0, %v298
        %v311 = vsub.f32 0.0, %v299
        %v312 = vsub.f32 0.0, %v300
        %v313 = vsub.f32 0.0, %v301
        %v314 = vsub.f32 0.0, %v302
        %v315 = vsub.f32 0.0, %v303
        %v316 = vsub.f32 0.0, %v304
        %v317 = vsub.f32 0.0, %v305
        %v318 = vmul.f32 %v306, 1.442695
        %v319 = vpow.pop %v318
        %v320 = vmul.f32 %v307, 1.442695
        %v321 = vpow.pop %v320
        %v322 = vmul.f32 %v308, 1.442695
        %v323 = vpow.pop %v322
        %v324 = vmul.f32 %v309, 1.442695
        %v325 = vpow.pop %v324
        %v326 = vmul.f32 %v310, 1.442695
        %v327 = vpow.pop %v326
        %v328 = vmul.f32 %v311, 1.442695
        %v329 = vpow.pop %v328
        %v330 = vmul.f32 %v312, 1.442695
        %v331 = vpow.pop %v330
        %v332 = vmul.f32 %v313, 1.442695
        %v333 = vpow.pop %v332
        %v334 = vmul.f32 %v314, 1.442695
        %v335 = vpow.pop %v334
        %v336 = vmul.f32 %v315, 1.442695
        %v337 = vpow.pop %v336
        %v338 = vmul.f32 %v316, 1.442695
        %v339 = vpow.pop %v338
        %v340 = vmul.f32 %v317, 1.442695
        %v341 = vpow.pop %v340
        %s342 = scalar_lea.vmem %s235, 1
        %v343 = vld [vmem:[%s342] ss:$2 sm:$0xf]
        %v344 = vld [vmem:[%s1 + $0x1] sm:$0x1]
        %346 = vset.pattern.permute.xlu0 0
        %347 = vperm.xlu0 %346, %v344
        %v348 = vpop.permute.xlu0 %347
        %v349 = vperm.slane %v348, 0
        %v351 = vmul.f32 %v343, %v349
        %s352 = scalar_lea.vmem %s2, 24
        %v353 = vld [vmem:[%s352] sm:$0xff]
        %v354 = vld [vmem:[%s352 + $0x8] sm:$0xff]
        %v355 = vld [vmem:[%s352 + $0x10] sm:$0xff]
        %v357 = vperm.slane %v351, 0
        %v358 = vperm.slane %v351, 1
        %v359 = vperm.slane %v351, 2
        %v360 = vperm.slane %v351, 3
        %366 = vset.pattern.permute.xlu0 0
        %367 = vperm.xlu0 %366, %v353
        %v368 = vpop.permute.xlu0 %367
        %371 = vset.pattern.permute.xlu0 0
        %372 = vperm.xlu0 %371, %v354
        %v373 = vpop.permute.xlu0 %372
        %376 = vset.pattern.permute.xlu0 0
        %377 = vperm.xlu0 %376, %v355
        %v378 = vpop.permute.xlu0 %377
        %v380 = vsub.f32 %v357, %v368
        %v381 = vsub.f32 %v358, %v368
        %v382 = vsub.f32 %v359, %v368
        %v383 = vsub.f32 %v360, %v368
        %v384 = vsub.f32 %v357, %v373
        %v385 = vsub.f32 %v358, %v373
        %v386 = vsub.f32 %v359, %v373
        %v387 = vsub.f32 %v360, %v373
        %v388 = vsub.f32 %v357, %v378
        %v389 = vsub.f32 %v358, %v378
        %v390 = vsub.f32 %v359, %v378
        %v391 = vsub.f32 %v360, %v378
        %v392 = vmul.f32 %v380, %v380
        %v393 = vmul.f32 %v381, %v381
        %v394 = vmul.f32 %v382, %v382
        %v395 = vmul.f32 %v383, %v383
        %v396 = vmul.f32 %v384, %v384
        %v397 = vmul.f32 %v385, %v385
        %v398 = vmul.f32 %v386, %v386
        %v399 = vmul.f32 %v387, %v387
        %v400 = vmul.f32 %v388, %v388
        %v401 = vmul.f32 %v389, %v389
        %v402 = vmul.f32 %v390, %v390
        %v403 = vmul.f32 %v391, %v391
        %v404 = vsub.f32 0.0, %v392
        %v405 = vsub.f32 0.0, %v393
        %v406 = vsub.f32 0.0, %v394
        %v407 = vsub.f32 0.0, %v395
        %v408 = vsub.f32 0.0, %v396
        %v409 = vsub.f32 0.0, %v397
        %v410 = vsub.f32 0.0, %v398
        %v411 = vsub.f32 0.0, %v399
        %v412 = vsub.f32 0.0, %v400
        %v413 = vsub.f32 0.0, %v401
        %v414 = vsub.f32 0.0, %v402
        %v415 = vsub.f32 0.0, %v403
        %v416 = vmul.f32 %v404, 1.442695
        %v417 = vpow.pop %v416
        %v418 = vmul.f32 %v405, 1.442695
        %v419 = vpow.pop %v418
        %v420 = vmul.f32 %v406, 1.442695
        %v421 = vpow.pop %v420
        %v422 = vmul.f32 %v407, 1.442695
        %v423 = vpow.pop %v422
        %v424 = vmul.f32 %v408, 1.442695
        %v425 = vpow.pop %v424
        %v426 = vmul.f32 %v409, 1.442695
        %v427 = vpow.pop %v426
        %v428 = vmul.f32 %v410, 1.442695
        %v429 = vpow.pop %v428
        %v430 = vmul.f32 %v411, 1.442695
        %v431 = vpow.pop %v430
        %v432 = vmul.f32 %v412, 1.442695
        %v433 = vpow.pop %v432
        %v434 = vmul.f32 %v413, 1.442695
        %v435 = vpow.pop %v434
        %v436 = vmul.f32 %v414, 1.442695
        %v437 = vpow.pop %v436
        %v438 = vmul.f32 %v415, 1.442695
        %v439 = vpow.pop %v438
        %v440 = vld [vmem:[%s3] sm:$0xff]
        %v441 = vld [vmem:[%s3 + $0x8] sm:$0xff]
        %v442 = vld [vmem:[%s3 + $0x10] sm:$0xff]
        %v443 = vld [vmem:[%s3 + $0x18] sm:$0xff]
        %v444 = vld [vmem:[%s4] sm:$0xff]
        %v445 = vld [vmem:[%s4 + $0x8] sm:$0xff]
        %v446 = vld [vmem:[%s4 + $0x10] sm:$0xff]
        %v447 = vld [vmem:[%s4 + $0x18] sm:$0xff]
        %449 = vset.pattern.permute.xlu0 0
        %450 = vperm.xlu0 %449, %v444
        %v451 = vpop.permute.xlu0 %450
        %454 = vset.pattern.permute.xlu0 0
        %455 = vperm.xlu0 %454, %v445
        %v456 = vpop.permute.xlu0 %455
        %459 = vset.pattern.permute.xlu0 0
        %460 = vperm.xlu0 %459, %v446
        %v461 = vpop.permute.xlu0 %460
        %464 = vset.pattern.permute.xlu0 0
        %465 = vperm.xlu0 %464, %v447
        %v466 = vpop.permute.xlu0 %465
        %vm468 = vcmask 392192
        %v470 = vsel %vm468, %v440, 0
        %v473 = vsel %vm468, %v441, 0
        %v476 = vsel %vm468, %v442, 0
        %v479 = vsel %vm468, %v443, 0
        %481 = vmatpush.msra.mxu0 0.0
        %482 = vmatpush.msra.mxu0 0.0
        %483 = vmatpush.msra.mxu0 0.0
        %484 = vmatpush.msra.mxu0 0.0
        %485 = vmatpush.msra.mxu0 0.0
        %486 = vmatpush.msra.mxu0 0.0
        %487 = vmatpush.msra.mxu0 0.0
        %488 = vmatpush.msra.mxu0 0.0
        %489 = vmatpush.msra.mxu0 0.0
        %490 = vmatpush.msra.mxu0 0.0
        %491 = vmatpush.msra.mxu0 %v433
        %492 = vmatpush.msra.mxu0 %v425
        %493 = vmatpush.msra.mxu0 %v417
        %494 = vmatpush.msra.mxu0 %v335
        %495 = vmatpush.msra.mxu0 %v327
        %496 = vmatpush.msra.mxu0 %v319
        %497 = vmatmul.f32.gmra.mxu0 %v470
        %v498 = vpop.f32.mrf.mxu0
        %v499 = vadd.f32 %v451, %v498
        %500 = vmatmul.f32.gmra.mxu0 %v473
        %v501 = vpop.f32.mrf.mxu0
        %v502 = vadd.f32 %v456, %v501
        %503 = vmatmul.f32.gmra.mxu0 %v476
        %v504 = vpop.f32.mrf.mxu0
        %v505 = vadd.f32 %v461, %v504
        %506 = vmatmul.f32.gmra.mxu0 %v479
        %v507 = vpop.f32.mrf.mxu0
        %v508 = vadd.f32 %v466, %v507
        %509 = vdwg.mxu0
        %510 = vmatpush.msra.mxu0 0.0
        %511 = vmatpush.msra.mxu0 0.0
        %512 = vmatpush.msra.mxu0 0.0
        %513 = vmatpush.msra.mxu0 0.0
        %514 = vmatpush.msra.mxu0 0.0
        %515 = vmatpush.msra.mxu0 0.0
        %516 = vmatpush.msra.mxu0 0.0
        %517 = vmatpush.msra.mxu0 0.0
        %518 = vmatpush.msra.mxu0 0.0
        %519 = vmatpush.msra.mxu0 0.0
        %520 = vmatpush.msra.mxu0 %v435
        %521 = vmatpush.msra.mxu0 %v427
        %522 = vmatpush.msra.mxu0 %v419
        %523 = vmatpush.msra.mxu0 %v337
        %524 = vmatpush.msra.mxu0 %v329
        %525 = vmatpush.msra.mxu0 %v321
        %526 = vmatmul.f32.gmra.mxu0 %v470
        %v527 = vpop.f32.mrf.mxu0
        %v528 = vadd.f32 %v451, %v527
        %529 = vmatmul.f32.gmra.mxu0 %v473
        %v530 = vpop.f32.mrf.mxu0
        %v531 = vadd.f32 %v456, %v530
        %532 = vmatmul.f32.gmra.mxu0 %v476
        %v533 = vpop.f32.mrf.mxu0
        %v534 = vadd.f32 %v461, %v533
        %535 = vmatmul.f32.gmra.mxu0 %v479
        %v536 = vpop.f32.mrf.mxu0
        %v537 = vadd.f32 %v466, %v536
        %538 = vdwg.mxu0
        %539 = vmatpush.msra.mxu0 0.0
        %540 = vmatpush.msra.mxu0 0.0
        %541 = vmatpush.msra.mxu0 0.0
        %542 = vmatpush.msra.mxu0 0.0
        %543 = vmatpush.msra.mxu0 0.0
        %544 = vmatpush.msra.mxu0 0.0
        %545 = vmatpush.msra.mxu0 0.0
        %546 = vmatpush.msra.mxu0 0.0
        %547 = vmatpush.msra.mxu0 0.0
        %548 = vmatpush.msra.mxu0 0.0
        %549 = vmatpush.msra.mxu0 %v437
        %550 = vmatpush.msra.mxu0 %v429
        %551 = vmatpush.msra.mxu0 %v421
        %552 = vmatpush.msra.mxu0 %v339
        %553 = vmatpush.msra.mxu0 %v331
        %554 = vmatpush.msra.mxu0 %v323
        %555 = vmatmul.f32.gmra.mxu0 %v470
        %v556 = vpop.f32.mrf.mxu0
        %v557 = vadd.f32 %v451, %v556
        %558 = vmatmul.f32.gmra.mxu0 %v473
        %v559 = vpop.f32.mrf.mxu0
        %v560 = vadd.f32 %v456, %v559
        %561 = vmatmul.f32.gmra.mxu0 %v476
        %v562 = vpop.f32.mrf.mxu0
        %v563 = vadd.f32 %v461, %v562
        %564 = vmatmul.f32.gmra.mxu0 %v479
        %v565 = vpop.f32.mrf.mxu0
        %v566 = vadd.f32 %v466, %v565
        %567 = vdwg.mxu0
        %568 = vmatpush.msra.mxu0 0.0
        %569 = vmatpush.msra.mxu0 0.0
        %570 = vmatpush.msra.mxu0 0.0
        %571 = vmatpush.msra.mxu0 0.0
        %572 = vmatpush.msra.mxu0 0.0
        %573 = vmatpush.msra.mxu0 0.0
        %574 = vmatpush.msra.mxu0 0.0
        %575 = vmatpush.msra.mxu0 0.0
        %576 = vmatpush.msra.mxu0 0.0
        %577 = vmatpush.msra.mxu0 0.0
        %578 = vmatpush.msra.mxu0 %v439
        %579 = vmatpush.msra.mxu0 %v431
        %580 = vmatpush.msra.mxu0 %v423
        %581 = vmatpush.msra.mxu0 %v341
        %582 = vmatpush.msra.mxu0 %v333
        %583 = vmatpush.msra.mxu0 %v325
        %584 = vmatmul.f32.gmra.mxu0 %v470
        %v585 = vpop.f32.mrf.mxu0
        %v586 = vadd.f32 %v451, %v585
        %587 = vmatmul.f32.gmra.mxu0 %v473
        %v588 = vpop.f32.mrf.mxu0
        %v589 = vadd.f32 %v456, %v588
        %590 = vmatmul.f32.gmra.mxu0 %v476
        %v591 = vpop.f32.mrf.mxu0
        %v592 = vadd.f32 %v461, %v591
        %593 = vmatmul.f32.gmra.mxu0 %v479
        %v594 = vpop.f32.mrf.mxu0
        %v595 = vadd.f32 %v466, %v594
        %596 = vdwg.mxu0
        %597 = vxpose.xlu0.b32.start [1/16] %v499, 128
        %598 = vxpose.xlu0.b32.cont [2/16] %v502, 128
        %599 = vxpose.xlu0.b32.cont [3/16] %v505, 128
        %600 = vxpose.xlu0.b32.cont [4/16] %v508, 128
        %601 = vxpose.xlu0.b32.cont [5/16] 0.0, 128
        %602 = vxpose.xlu0.b32.cont [6/16] 0.0, 128
        %603 = vxpose.xlu0.b32.cont [7/16] 0.0, 128
        %604 = vxpose.xlu0.b32.cont [8/16] 0.0, 128
        %605 = vxpose.xlu0.b32.cont [9/16] 0.0, 128
        %606 = vxpose.xlu0.b32.cont [10/16] 0.0, 128
        %607 = vxpose.xlu0.b32.cont [11/16] 0.0, 128
        %608 = vxpose.xlu0.b32.cont [12/16] 0.0, 128
        %609 = vxpose.xlu0.b32.cont [13/16] 0.0, 128
        %610 = vxpose.xlu0.b32.cont [14/16] 0.0, 128
        %611 = vxpose.xlu0.b32.cont [15/16] 0.0, 128
        %612 = vxpose.xlu0.b32.end [16/16] 0.0, 128
        %v613 = vpop.trf.xlu0
        %v614 = vpop.trf.xlu0
        %v615 = vpop.trf.xlu0
        %v616 = vpop.trf.xlu0
        %v617 = vpop.trf.xlu0
        %v618 = vpop.trf.xlu0
        %v619 = vpop.trf.xlu0
        %v620 = vpop.trf.xlu0
        %v621 = vpop.trf.xlu0
        %v622 = vpop.trf.xlu0
        %v623 = vpop.trf.xlu0
        %v624 = vpop.trf.xlu0
        %v625 = vpop.trf.xlu0
        %v626 = vpop.trf.xlu0
        %v627 = vpop.trf.xlu0
        %v628 = vpop.trf.xlu0
        %629 = vxpose.xlu0.b32.start [1/16] %v528, 128
        %630 = vxpose.xlu0.b32.cont [2/16] %v531, 128
        %631 = vxpose.xlu0.b32.cont [3/16] %v534, 128
        %632 = vxpose.xlu0.b32.cont [4/16] %v537, 128
        %633 = vxpose.xlu0.b32.cont [5/16] 0.0, 128
        %634 = vxpose.xlu0.b32.cont [6/16] 0.0, 128
        %635 = vxpose.xlu0.b32.cont [7/16] 0.0, 128
        %636 = vxpose.xlu0.b32.cont [8/16] 0.0, 128
        %637 = vxpose.xlu0.b32.cont [9/16] 0.0, 128
        %638 = vxpose.xlu0.b32.cont [10/16] 0.0, 128
        %639 = vxpose.xlu0.b32.cont [11/16] 0.0, 128
        %640 = vxpose.xlu0.b32.cont [12/16] 0.0, 128
        %641 = vxpose.xlu0.b32.cont [13/16] 0.0, 128
        %642 = vxpose.xlu0.b32.cont [14/16] 0.0, 128
        %643 = vxpose.xlu0.b32.cont [15/16] 0.0, 128
        %644 = vxpose.xlu0.b32.end [16/16] 0.0, 128
        %v645 = vpop.trf.xlu0
        %v646 = vpop.trf.xlu0
        %v647 = vpop.trf.xlu0
        %v648 = vpop.trf.xlu0
        %v649 = vpop.trf.xlu0
        %v650 = vpop.trf.xlu0
        %v651 = vpop.trf.xlu0
        %v652 = vpop.trf.xlu0
        %v653 = vpop.trf.xlu0
        %v654 = vpop.trf.xlu0
        %v655 = vpop.trf.xlu0
        %v656 = vpop.trf.xlu0
        %v657 = vpop.trf.xlu0
        %v658 = vpop.trf.xlu0
        %v659 = vpop.trf.xlu0
        %v660 = vpop.trf.xlu0
        %661 = vxpose.xlu0.b32.start [1/16] %v557, 128
        %662 = vxpose.xlu0.b32.cont [2/16] %v560, 128
        %663 = vxpose.xlu0.b32.cont [3/16] %v563, 128
        %664 = vxpose.xlu0.b32.cont [4/16] %v566, 128
        %665 = vxpose.xlu0.b32.cont [5/16] 0.0, 128
        %666 = vxpose.xlu0.b32.cont [6/16] 0.0, 128
        %667 = vxpose.xlu0.b32.cont [7/16] 0.0, 128
        %668 = vxpose.xlu0.b32.cont [8/16] 0.0, 128
        %669 = vxpose.xlu0.b32.cont [9/16] 0.0, 128
        %670 = vxpose.xlu0.b32.cont [10/16] 0.0, 128
        %671 = vxpose.xlu0.b32.cont [11/16] 0.0, 128
        %672 = vxpose.xlu0.b32.cont [12/16] 0.0, 128
        %673 = vxpose.xlu0.b32.cont [13/16] 0.0, 128
        %674 = vxpose.xlu0.b32.cont [14/16] 0.0, 128
        %675 = vxpose.xlu0.b32.cont [15/16] 0.0, 128
        %676 = vxpose.xlu0.b32.end [16/16] 0.0, 128
        %v677 = vpop.trf.xlu0
        %v678 = vpop.trf.xlu0
        %v679 = vpop.trf.xlu0
        %v680 = vpop.trf.xlu0
        %v681 = vpop.trf.xlu0
        %v682 = vpop.trf.xlu0
        %v683 = vpop.trf.xlu0
        %v684 = vpop.trf.xlu0
        %v685 = vpop.trf.xlu0
        %v686 = vpop.trf.xlu0
        %v687 = vpop.trf.xlu0
        %v688 = vpop.trf.xlu0
        %v689 = vpop.trf.xlu0
        %v690 = vpop.trf.xlu0
        %v691 = vpop.trf.xlu0
        %v692 = vpop.trf.xlu0
        %693 = vxpose.xlu0.b32.start [1/16] %v586, 128
        %694 = vxpose.xlu0.b32.cont [2/16] %v589, 128
        %695 = vxpose.xlu0.b32.cont [3/16] %v592, 128
        %696 = vxpose.xlu0.b32.cont [4/16] %v595, 128
        %697 = vxpose.xlu0.b32.cont [5/16] 0.0, 128
        %698 = vxpose.xlu0.b32.cont [6/16] 0.0, 128
        %699 = vxpose.xlu0.b32.cont [7/16] 0.0, 128
        %700 = vxpose.xlu0.b32.cont [8/16] 0.0, 128
        %701 = vxpose.xlu0.b32.cont [9/16] 0.0, 128
        %702 = vxpose.xlu0.b32.cont [10/16] 0.0, 128
        %703 = vxpose.xlu0.b32.cont [11/16] 0.0, 128
        %704 = vxpose.xlu0.b32.cont [12/16] 0.0, 128
        %705 = vxpose.xlu0.b32.cont [13/16] 0.0, 128
        %706 = vxpose.xlu0.b32.cont [14/16] 0.0, 128
        %707 = vxpose.xlu0.b32.cont [15/16] 0.0, 128
        %708 = vxpose.xlu0.b32.end [16/16] 0.0, 128
        %v709 = vpop.trf.xlu0
        %v710 = vpop.trf.xlu0
        %v711 = vpop.trf.xlu0
        %v712 = vpop.trf.xlu0
        %v713 = vpop.trf.xlu0
        %v714 = vpop.trf.xlu0
        %v715 = vpop.trf.xlu0
        %v716 = vpop.trf.xlu0
        %v717 = vpop.trf.xlu0
        %v718 = vpop.trf.xlu0
        %v719 = vpop.trf.xlu0
        %v720 = vpop.trf.xlu0
        %v721 = vpop.trf.xlu0
        %v722 = vpop.trf.xlu0
        %v723 = vpop.trf.xlu0
        %v724 = vpop.trf.xlu0
        %vm725 = vcmask 261120
        %726 = vst.msk [vmem:[%s226] sm:$0xff] %vm725, %v613
        %727 = vst.msk [vmem:[%s226 + $0x8] sm:$0xff] %vm725, %v614
        %728 = vst.msk [vmem:[%s226 + $0x10] sm:$0xff] %vm725, %v615
        %729 = vst.msk [vmem:[%s226 + $0x18] sm:$0xff] %vm725, %v616
        %730 = vst.msk [vmem:[%s226 + $0x20] sm:$0xff] %vm725, %v617
        %731 = vst.msk [vmem:[%s226 + $0x28] sm:$0xff] %vm725, %v618
        %732 = vst.msk [vmem:[%s226 + $0x30] sm:$0xff] %vm725, %v619
        %733 = vst.msk [vmem:[%s226 + $0x38] sm:$0xff] %vm725, %v620
        %734 = vst.msk [vmem:[%s226 + $0x40] sm:$0xff] %vm725, %v621
        %735 = vst.msk [vmem:[%s226 + $0x48] sm:$0xff] %vm725, %v622
        %736 = vst.msk [vmem:[%s226 + $0x50] sm:$0xff] %vm725, %v623
        %737 = vst.msk [vmem:[%s226 + $0x58] sm:$0xff] %vm725, %v624
        %738 = vst.msk [vmem:[%s226 + $0x60] sm:$0xff] %vm725, %v625
        %739 = vst.msk [vmem:[%s226 + $0x68] sm:$0xff] %vm725, %v626
        %740 = vst.msk [vmem:[%s226 + $0x70] sm:$0xff] %vm725, %v627
        %741 = vst.msk [vmem:[%s226 + $0x78] sm:$0xff] %vm725, %v628
        %742 = vst.msk [vmem:[%s226 + $0x80] sm:$0xff] %vm725, %v645
        %743 = vst.msk [vmem:[%s226 + $0x88] sm:$0xff] %vm725, %v646
        %744 = vst.msk [vmem:[%s226 + $0x90] sm:$0xff] %vm725, %v647
        %745 = vst.msk [vmem:[%s226 + $0x98] sm:$0xff] %vm725, %v648
        %746 = vst.msk [vmem:[%s226 + $0xa0] sm:$0xff] %vm725, %v649
        %747 = vst.msk [vmem:[%s226 + $0xa8] sm:$0xff] %vm725, %v650
        %748 = vst.msk [vmem:[%s226 + $0xb0] sm:$0xff] %vm725, %v651
        %749 = vst.msk [vmem:[%s226 + $0xb8] sm:$0xff] %vm725, %v652
        %750 = vst.msk [vmem:[%s226 + $0xc0] sm:$0xff] %vm725, %v653
        %751 = vst.msk [vmem:[%s226 + $0xc8] sm:$0xff] %vm725, %v654
        %752 = vst.msk [vmem:[%s226 + $0xd0] sm:$0xff] %vm725, %v655
        %753 = vst.msk [vmem:[%s226 + $0xd8] sm:$0xff] %vm725, %v656
        %754 = vst.msk [vmem:[%s226 + $0xe0] sm:$0xff] %vm725, %v657
        %755 = vst.msk [vmem:[%s226 + $0xe8] sm:$0xff] %vm725, %v658
        %756 = vst.msk [vmem:[%s226 + $0xf0] sm:$0xff] %vm725, %v659
        %757 = vst.msk [vmem:[%s226 + $0xf8] sm:$0xff] %vm725, %v660
        %758 = vst.msk [vmem:[%s226 + $0x100] sm:$0xff] %vm725, %v677
        %759 = vst.msk [vmem:[%s226 + $0x108] sm:$0xff] %vm725, %v678
        %760 = vst.msk [vmem:[%s226 + $0x110] sm:$0xff] %vm725, %v679
        %761 = vst.msk [vmem:[%s226 + $0x118] sm:$0xff] %vm725, %v680
        %762 = vst.msk [vmem:[%s226 + $0x120] sm:$0xff] %vm725, %v681
        %763 = vst.msk [vmem:[%s226 + $0x128] sm:$0xff] %vm725, %v682
        %764 = vst.msk [vmem:[%s226 + $0x130] sm:$0xff] %vm725, %v683
        %765 = vst.msk [vmem:[%s226 + $0x138] sm:$0xff] %vm725, %v684
        %766 = vst.msk [vmem:[%s226 + $0x140] sm:$0xff] %vm725, %v685
        %767 = vst.msk [vmem:[%s226 + $0x148] sm:$0xff] %vm725, %v686
        %768 = vst.msk [vmem:[%s226 + $0x150] sm:$0xff] %vm725, %v687
        %769 = vst.msk [vmem:[%s226 + $0x158] sm:$0xff] %vm725, %v688
        %770 = vst.msk [vmem:[%s226 + $0x160] sm:$0xff] %vm725, %v689
        %771 = vst.msk [vmem:[%s226 + $0x168] sm:$0xff] %vm725, %v690
        %772 = vst.msk [vmem:[%s226 + $0x170] sm:$0xff] %vm725, %v691
        %773 = vst.msk [vmem:[%s226 + $0x178] sm:$0xff] %vm725, %v692
        %774 = vst.msk [vmem:[%s226 + $0x180] sm:$0xff] %vm725, %v709
        %775 = vst.msk [vmem:[%s226 + $0x188] sm:$0xff] %vm725, %v710
        %776 = vst.msk [vmem:[%s226 + $0x190] sm:$0xff] %vm725, %v711
        %777 = vst.msk [vmem:[%s226 + $0x198] sm:$0xff] %vm725, %v712
        %778 = vst.msk [vmem:[%s226 + $0x1a0] sm:$0xff] %vm725, %v713
        %779 = vst.msk [vmem:[%s226 + $0x1a8] sm:$0xff] %vm725, %v714
        %780 = vst.msk [vmem:[%s226 + $0x1b0] sm:$0xff] %vm725, %v715
        %781 = vst.msk [vmem:[%s226 + $0x1b8] sm:$0xff] %vm725, %v716
        %782 = vst.msk [vmem:[%s226 + $0x1c0] sm:$0xff] %vm725, %v717
        %783 = vst.msk [vmem:[%s226 + $0x1c8] sm:$0xff] %vm725, %v718
        %784 = vst.msk [vmem:[%s226 + $0x1d0] sm:$0xff] %vm725, %v719
        %785 = vst.msk [vmem:[%s226 + $0x1d8] sm:$0xff] %vm725, %v720
        %786 = vst.msk [vmem:[%s226 + $0x1e0] sm:$0xff] %vm725, %v721
        %787 = vst.msk [vmem:[%s226 + $0x1e8] sm:$0xff] %vm725, %v722
        %788 = vst.msk [vmem:[%s226 + $0x1f0] sm:$0xff] %vm725, %v723
        %789 = vst.msk [vmem:[%s226 + $0x1f8] sm:$0xff] %vm725, %v724
        %s790 = sand.u32 %s134, 1
        %s791 = sand.u32 %s134, 1
        %s792 = smul.addr %s791, 512
        %s793 = scalar_lea.vmem [#allocation2], %s792
        // Predicated region
        $region41: #{tpu_custom_call.1} parent=39 // pred_check
          %p794 = pneg %p144
        $region42: #{tpu_custom_call.1} parent=39 // pred_check_branch
          %796 = sbr.rel (%p794) target = $region44
        $region43: #{tpu_custom_call.1} parent=39 // pred_region
          %s797 = smul.u32 64, %s16
          %s798 = ssub.s32 98, %s797
          %p799 = scmp.lt.s32.totalorder %s798, 64
          %s800 = scalar_select %p799, %s798, 64
          %s801 = smul.u32 8, %s800
          %p802 = scmp.ne.s32.totalorder 0, %s801
          %s803 = smul.addr %s797, 8
          %s804 = scalar_lea.vmem %s5, %s803
          // Predicated region
          $region45: #{tpu_custom_call.1} parent=43 // pred_check
            %p805 = pneg %p802
          $region46: #{tpu_custom_call.1} parent=43 // pred_check_branch
            %807 = sbr.rel (%p805) target = $region48
          $region47: #{tpu_custom_call.1} parent=43 // pred_region
            // Predicated region
            $region49: #{tpu_custom_call.1} parent=47 // pred_check
              _
            $region50: #{tpu_custom_call.1} parent=47 // pred_check_branch
              %809 = sbr.rel (0) target = $region52
            $region51: #{tpu_custom_call.1} parent=47 // pred_region
              // Predicated region
              $region71: #{tpu_custom_call.1} parent=51 // pred_check
                _
              $region72: #{tpu_custom_call.1} parent=51 // pred_check_branch
                %921 = sbr.rel (0) target = $region74
              $region73: #{tpu_custom_call.1} parent=51 // pred_region
                %s922 = sshrl.u32 %s800, 5
                // While loop
                $region75: #{tpu_custom_call.1} parent=73 // loop_pre_header
                  _
                $region76: #{tpu_custom_call.1} parent=73 // loop_header
                  %s924 = sphi 0, %s926
                  %p925 = scmp.ge.s32.totalorder %s924, %s922
                  %s929 = sphi 0, %s998
                  %s930 = sphi %s793, %s1001
                  %s931 = sphi %s804, %s1002
                $region77: #{tpu_custom_call.1} parent=73 // loop_header_branch
                  %928 = sbr.rel (%p925) target = $region81
                $region78: #{tpu_custom_call.1} parent=73 // loop_body
                  %v932 = vld [vmem:[%s930] sm:$0xff]
                  %933 = vst [vmem:[%s931] sm:$0xff] %v932
                  %v934 = vld [vmem:[%s930 + $0x8] sm:$0xff]
                  %935 = vst [vmem:[%s931 + $0x8] sm:$0xff] %v934
                  %v936 = vld [vmem:[%s930 + $0x10] sm:$0xff]
                  %937 = vst [vmem:[%s931 + $0x10] sm:$0xff] %v936
                  %v938 = vld [vmem:[%s930 + $0x18] sm:$0xff]
                  %939 = vst [vmem:[%s931 + $0x18] sm:$0xff] %v938
                  %v940 = vld [vmem:[%s930 + $0x20] sm:$0xff]
                  %941 = vst [vmem:[%s931 + $0x20] sm:$0xff] %v940
                  %v942 = vld [vmem:[%s930 + $0x28] sm:$0xff]
                  %943 = vst [vmem:[%s931 + $0x28] sm:$0xff] %v942
                  %v944 = vld [vmem:[%s930 + $0x30] sm:$0xff]
                  %945 = vst [vmem:[%s931 + $0x30] sm:$0xff] %v944
                  %v946 = vld [vmem:[%s930 + $0x38] sm:$0xff]
                  %947 = vst [vmem:[%s931 + $0x38] sm:$0xff] %v946
                  %v948 = vld [vmem:[%s930 + $0x40] sm:$0xff]
                  %949 = vst [vmem:[%s931 + $0x40] sm:$0xff] %v948
                  %v950 = vld [vmem:[%s930 + $0x48] sm:$0xff]
                  %951 = vst [vmem:[%s931 + $0x48] sm:$0xff] %v950
                  %v952 = vld [vmem:[%s930 + $0x50] sm:$0xff]
                  %953 = vst [vmem:[%s931 + $0x50] sm:$0xff] %v952
                  %v954 = vld [vmem:[%s930 + $0x58] sm:$0xff]
                  %955 = vst [vmem:[%s931 + $0x58] sm:$0xff] %v954
                  %v956 = vld [vmem:[%s930 + $0x60] sm:$0xff]
                  %957 = vst [vmem:[%s931 + $0x60] sm:$0xff] %v956
                  %v958 = vld [vmem:[%s930 + $0x68] sm:$0xff]
                  %959 = vst [vmem:[%s931 + $0x68] sm:$0xff] %v958
                  %v960 = vld [vmem:[%s930 + $0x70] sm:$0xff]
                  %961 = vst [vmem:[%s931 + $0x70] sm:$0xff] %v960
                  %v962 = vld [vmem:[%s930 + $0x78] sm:$0xff]
                  %963 = vst [vmem:[%s931 + $0x78] sm:$0xff] %v962
                  %v964 = vld [vmem:[%s930 + $0x80] sm:$0xff]
                  %965 = vst [vmem:[%s931 + $0x80] sm:$0xff] %v964
                  %v966 = vld [vmem:[%s930 + $0x88] sm:$0xff]
                  %967 = vst [vmem:[%s931 + $0x88] sm:$0xff] %v966
                  %v968 = vld [vmem:[%s930 + $0x90] sm:$0xff]
                  %969 = vst [vmem:[%s931 + $0x90] sm:$0xff] %v968
                  %v970 = vld [vmem:[%s930 + $0x98] sm:$0xff]
                  %971 = vst [vmem:[%s931 + $0x98] sm:$0xff] %v970
                  %v972 = vld [vmem:[%s930 + $0xa0] sm:$0xff]
                  %973 = vst [vmem:[%s931 + $0xa0] sm:$0xff] %v972
                  %v974 = vld [vmem:[%s930 + $0xa8] sm:$0xff]
                  %975 = vst [vmem:[%s931 + $0xa8] sm:$0xff] %v974
                  %v976 = vld [vmem:[%s930 + $0xb0] sm:$0xff]
                  %977 = vst [vmem:[%s931 + $0xb0] sm:$0xff] %v976
                  %v978 = vld [vmem:[%s930 + $0xb8] sm:$0xff]
                  %979 = vst [vmem:[%s931 + $0xb8] sm:$0xff] %v978
                  %v980 = vld [vmem:[%s930 + $0xc0] sm:$0xff]
                  %981 = vst [vmem:[%s931 + $0xc0] sm:$0xff] %v980
                  %v982 = vld [vmem:[%s930 + $0xc8] sm:$0xff]
                  %983 = vst [vmem:[%s931 + $0xc8] sm:$0xff] %v982
                  %v984 = vld [vmem:[%s930 + $0xd0] sm:$0xff]
                  %985 = vst [vmem:[%s931 + $0xd0] sm:$0xff] %v984
                  %v986 = vld [vmem:[%s930 + $0xd8] sm:$0xff]
                  %987 = vst [vmem:[%s931 + $0xd8] sm:$0xff] %v986
                  %v988 = vld [vmem:[%s930 + $0xe0] sm:$0xff]
                  %989 = vst [vmem:[%s931 + $0xe0] sm:$0xff] %v988
                  %v990 = vld [vmem:[%s930 + $0xe8] sm:$0xff]
                  %991 = vst [vmem:[%s931 + $0xe8] sm:$0xff] %v990
                  %v992 = vld [vmem:[%s930 + $0xf0] sm:$0xff]
                  %993 = vst [vmem:[%s931 + $0xf0] sm:$0xff] %v992
                  %v994 = vld [vmem:[%s930 + $0xf8] sm:$0xff]
                  %995 = vst [vmem:[%s931 + $0xf8] sm:$0xff] %v994
                  %s996 = sadd.s32 1, %s929
                  %p997 = scmp.ge.s32.totalorder %s996, %s922
                  %s998 = scalar_select %p997, 0, %s996
                  %s999 = smul.u32 %s998, 256
                  %s1000 = smul.u32 %s998, 256
                  %s1001 = scalar_lea.vmem %s793, %s999 [#allocation2]
                  %s1002 = scalar_lea.vmem %s804, %s1000
                $region79: #{tpu_custom_call.1} parent=73 // loop_footer
                  %s926 = sadd.s32 %s924, 1
                $region80: #{tpu_custom_call.1} parent=73 // loop_footer_branch
                  %923 = sbr.rel target = $region76
                $region81: #{tpu_custom_call.1} parent=73 // loop_exit
                  _
                %s1003 = sshrl.u32 %s800, 5
                %s1004 = sand.u32 %s800, 31
                %s1005 = smul.u32 %s1003, 32
                %s1006 = smul.u32 8, %s1005
                %s1007 = scalar_lea.vmem %s793, %s1006 [#allocation2]
                %s1008 = smul.u32 8, %s1005
                %s1009 = scalar_lea.vmem %s804, %s1008
                // While loop
                $region82: #{tpu_custom_call.1} parent=73 // loop_pre_header
                  _
                $region83: #{tpu_custom_call.1} parent=73 // loop_header
                  %s1011 = sphi 0, %s1013
                  %p1012 = scmp.ge.s32.totalorder %s1011, %s1004
                  %s1016 = sphi 0, %s1023
                  %s1017 = sphi %s1007, %s1026
                  %s1018 = sphi %s1009, %s1027
                $region84: #{tpu_custom_call.1} parent=73 // loop_header_branch
                  %1015 = sbr.rel (%p1012) target = $region88
                $region85: #{tpu_custom_call.1} parent=73 // loop_body
                  %v1019 = vld [vmem:[%s1017] sm:$0xff]
                  %1020 = vst [vmem:[%s1018] sm:$0xff] %v1019
                  %s1021 = sadd.s32 1, %s1016
                  %p1022 = scmp.ge.s32.totalorder %s1021, %s1004
                  %s1023 = scalar_select %p1022, 0, %s1021
                  %s1024 = smul.u32 %s1023, 8
                  %s1025 = smul.u32 %s1023, 8
                  %s1026 = scalar_lea.vmem %s1007, %s1024 [#allocation2]
                  %s1027 = scalar_lea.vmem %s1009, %s1025
                $region86: #{tpu_custom_call.1} parent=73 // loop_footer
                  %s1013 = sadd.s32 %s1011, 1
                $region87: #{tpu_custom_call.1} parent=73 // loop_footer_branch
                  %1010 = sbr.rel target = $region83
                $region88: #{tpu_custom_call.1} parent=73 // loop_exit
                  _
              $region74: #{tpu_custom_call.1} parent=51 // pred_fallthru
                _
              // Predicated region
              $region89: #{tpu_custom_call.1} parent=51 // pred_check
                _
              $region90: #{tpu_custom_call.1} parent=51 // pred_check_branch
                %1029 = sbr.rel target = $region92
              $region91: #{tpu_custom_call.1} parent=51 // pred_region
                _
              $region92: #{tpu_custom_call.1} parent=51 // pred_fallthru
                _
            $region52: #{tpu_custom_call.1} parent=47 // pred_fallthru
              _
            // Predicated region
            $region53: #{tpu_custom_call.1} parent=47 // pred_check
              _
            $region54: #{tpu_custom_call.1} parent=47 // pred_check_branch
              %811 = sbr.rel target = $region56
            $region55: #{tpu_custom_call.1} parent=47 // pred_region
              %s813 = ssub.s32 256, 1
              %s814 = sshrl.u32 %s800, 5
              // While loop
              $region57: #{tpu_custom_call.1} parent=55 // loop_pre_header
                _
              $region58: #{tpu_custom_call.1} parent=55 // loop_header
                %s816 = sphi 0, %s818
                %p817 = scmp.ge.s32.totalorder %s816, %s814
                %s821 = sphi 0, %s890
                %s822 = sphi %s793, %s893
                %s823 = sphi %s804, %s894
              $region59: #{tpu_custom_call.1} parent=55 // loop_header_branch
                %820 = sbr.rel (%p817) target = $region63
              $region60: #{tpu_custom_call.1} parent=55 // loop_body
                %v824 = vld [vmem:[%s822] sm:%s813]
                %825 = vst [vmem:[%s823] sm:%s813] %v824
                %v826 = vld [vmem:[%s822 + $0x8] sm:%s813]
                %827 = vst [vmem:[%s823 + $0x8] sm:%s813] %v826
                %v828 = vld [vmem:[%s822 + $0x10] sm:%s813]
                %829 = vst [vmem:[%s823 + $0x10] sm:%s813] %v828
                %v830 = vld [vmem:[%s822 + $0x18] sm:%s813]
                %831 = vst [vmem:[%s823 + $0x18] sm:%s813] %v830
                %v832 = vld [vmem:[%s822 + $0x20] sm:%s813]
                %833 = vst [vmem:[%s823 + $0x20] sm:%s813] %v832
                %v834 = vld [vmem:[%s822 + $0x28] sm:%s813]
                %835 = vst [vmem:[%s823 + $0x28] sm:%s813] %v834
                %v836 = vld [vmem:[%s822 + $0x30] sm:%s813]
                %837 = vst [vmem:[%s823 + $0x30] sm:%s813] %v836
                %v838 = vld [vmem:[%s822 + $0x38] sm:%s813]
                %839 = vst [vmem:[%s823 + $0x38] sm:%s813] %v838
                %v840 = vld [vmem:[%s822 + $0x40] sm:%s813]
                %841 = vst [vmem:[%s823 + $0x40] sm:%s813] %v840
                %v842 = vld [vmem:[%s822 + $0x48] sm:%s813]
                %843 = vst [vmem:[%s823 + $0x48] sm:%s813] %v842
                %v844 = vld [vmem:[%s822 + $0x50] sm:%s813]
                %845 = vst [vmem:[%s823 + $0x50] sm:%s813] %v844
                %v846 = vld [vmem:[%s822 + $0x58] sm:%s813]
                %847 = vst [vmem:[%s823 + $0x58] sm:%s813] %v846
                %v848 = vld [vmem:[%s822 + $0x60] sm:%s813]
                %849 = vst [vmem:[%s823 + $0x60] sm:%s813] %v848
                %v850 = vld [vmem:[%s822 + $0x68] sm:%s813]
                %851 = vst [vmem:[%s823 + $0x68] sm:%s813] %v850
                %v852 = vld [vmem:[%s822 + $0x70] sm:%s813]
                %853 = vst [vmem:[%s823 + $0x70] sm:%s813] %v852
                %v854 = vld [vmem:[%s822 + $0x78] sm:%s813]
                %855 = vst [vmem:[%s823 + $0x78] sm:%s813] %v854
                %v856 = vld [vmem:[%s822 + $0x80] sm:%s813]
                %857 = vst [vmem:[%s823 + $0x80] sm:%s813] %v856
                %v858 = vld [vmem:[%s822 + $0x88] sm:%s813]
                %859 = vst [vmem:[%s823 + $0x88] sm:%s813] %v858
                %v860 = vld [vmem:[%s822 + $0x90] sm:%s813]
                %861 = vst [vmem:[%s823 + $0x90] sm:%s813] %v860
                %v862 = vld [vmem:[%s822 + $0x98] sm:%s813]
                %863 = vst [vmem:[%s823 + $0x98] sm:%s813] %v862
                %v864 = vld [vmem:[%s822 + $0xa0] sm:%s813]
                %865 = vst [vmem:[%s823 + $0xa0] sm:%s813] %v864
                %v866 = vld [vmem:[%s822 + $0xa8] sm:%s813]
                %867 = vst [vmem:[%s823 + $0xa8] sm:%s813] %v866
                %v868 = vld [vmem:[%s822 + $0xb0] sm:%s813]
                %869 = vst [vmem:[%s823 + $0xb0] sm:%s813] %v868
                %v870 = vld [vmem:[%s822 + $0xb8] sm:%s813]
                %871 = vst [vmem:[%s823 + $0xb8] sm:%s813] %v870
                %v872 = vld [vmem:[%s822 + $0xc0] sm:%s813]
                %873 = vst [vmem:[%s823 + $0xc0] sm:%s813] %v872
                %v874 = vld [vmem:[%s822 + $0xc8] sm:%s813]
                %875 = vst [vmem:[%s823 + $0xc8] sm:%s813] %v874
                %v876 = vld [vmem:[%s822 + $0xd0] sm:%s813]
                %877 = vst [vmem:[%s823 + $0xd0] sm:%s813] %v876
                %v878 = vld [vmem:[%s822 + $0xd8] sm:%s813]
                %879 = vst [vmem:[%s823 + $0xd8] sm:%s813] %v878
                %v880 = vld [vmem:[%s822 + $0xe0] sm:%s813]
                %881 = vst [vmem:[%s823 + $0xe0] sm:%s813] %v880
                %v882 = vld [vmem:[%s822 + $0xe8] sm:%s813]
                %883 = vst [vmem:[%s823 + $0xe8] sm:%s813] %v882
                %v884 = vld [vmem:[%s822 + $0xf0] sm:%s813]
                %885 = vst [vmem:[%s823 + $0xf0] sm:%s813] %v884
                %v886 = vld [vmem:[%s822 + $0xf8] sm:%s813]
                %887 = vst [vmem:[%s823 + $0xf8] sm:%s813] %v886
                %s888 = sadd.s32 1, %s821
                %p889 = scmp.ge.s32.totalorder %s888, %s814
                %s890 = scalar_select %p889, 0, %s888
                %s891 = smul.u32 %s890, 256
                %s892 = smul.u32 %s890, 256
                %s893 = scalar_lea.vmem %s793, %s891 [#allocation2]
                %s894 = scalar_lea.vmem %s804, %s892
              $region61: #{tpu_custom_call.1} parent=55 // loop_footer
                %s818 = sadd.s32 %s816, 1
              $region62: #{tpu_custom_call.1} parent=55 // loop_footer_branch
                %815 = sbr.rel target = $region58
              $region63: #{tpu_custom_call.1} parent=55 // loop_exit
                _
              %s895 = sshrl.u32 %s800, 5
              %s896 = sand.u32 %s800, 31
              %s897 = smul.u32 %s895, 32
              %s898 = smul.u32 8, %s897
              %s899 = scalar_lea.vmem %s793, %s898 [#allocation2]
              %s900 = smul.u32 8, %s897
              %s901 = scalar_lea.vmem %s804, %s900
              // While loop
              $region64: #{tpu_custom_call.1} parent=55 // loop_pre_header
                _
              $region65: #{tpu_custom_call.1} parent=55 // loop_header
                %s903 = sphi 0, %s905
                %p904 = scmp.ge.s32.totalorder %s903, %s896
                %s908 = sphi 0, %s915
                %s909 = sphi %s899, %s918
                %s910 = sphi %s901, %s919
              $region66: #{tpu_custom_call.1} parent=55 // loop_header_branch
                %907 = sbr.rel (%p904) target = $region70
              $region67: #{tpu_custom_call.1} parent=55 // loop_body
                %v911 = vld [vmem:[%s909] sm:%s813]
                %912 = vst [vmem:[%s910] sm:%s813] %v911
                %s913 = sadd.s32 1, %s908
                %p914 = scmp.ge.s32.totalorder %s913, %s896
                %s915 = scalar_select %p914, 0, %s913
                %s916 = smul.u32 %s915, 8
                %s917 = smul.u32 %s915, 8
                %s918 = scalar_lea.vmem %s899, %s916 [#allocation2]
                %s919 = scalar_lea.vmem %s901, %s917
              $region68: #{tpu_custom_call.1} parent=55 // loop_footer
                %s905 = sadd.s32 %s903, 1
              $region69: #{tpu_custom_call.1} parent=55 // loop_footer_branch
                %902 = sbr.rel target = $region65
              $region70: #{tpu_custom_call.1} parent=55 // loop_exit
                _
            $region56: #{tpu_custom_call.1} parent=47 // pred_fallthru
              _
          $region48: #{tpu_custom_call.1} parent=43 // pred_fallthru
            _
          %1030 = vnop
        $region44: #{tpu_custom_call.1} parent=39 // pred_fallthru
          _
      $region40: #{tpu_custom_call.1} parent=5 // pred_fallthru
        _
      %p1031 = scmp.le.s32.totalorder 2, %s11
      // Predicated region
      $region93: #{tpu_custom_call.1} parent=5 // pred_check
        %p1032 = pneg %p1031
      $region94: #{tpu_custom_call.1} parent=5 // pred_check_branch
        %1034 = sbr.rel (%p1032) target = $region96
      $region95: #{tpu_custom_call.1} parent=5 // pred_region
        %s1035 = ssub.s32 %s11, 2
        // Predicated region
        $region97: #{tpu_custom_call.1} parent=95 // pred_check
          %p1036 = pneg %p150
        $region98: #{tpu_custom_call.1} parent=95 // pred_check_branch
          %1038 = sbr.rel (%p1036) target = $region100
        $region99: #{tpu_custom_call.1} parent=95 // pred_region
          %s1039 = sand.u32 %s135, 1
          %s1040 = sand.u32 %s135, 1
          %s1041 = smul.addr %s1040, 512
          %s1042 = scalar_lea.vmem [#allocation2], %s1041
        $region100: #{tpu_custom_call.1} parent=95 // pred_fallthru
          _
      $region96: #{tpu_custom_call.1} parent=5 // pred_fallthru
        _
    $region6: #{tpu_custom_call.1} parent=1 // loop_footer
      %s15 = sadd.s32 1, %s11
    $region7: #{tpu_custom_call.1} parent=1 // loop_footer_branch
      %10 = sbr.rel target = $region3
    $region8: #{tpu_custom_call.1} parent=1 // loop_exit
      _

</llo_original>
